<compile_context>
chip_gen: v7x
topology: tpu7x:2x2x1
jax: 0.10.0
libtpu: 0.0.40
codegen_flags: <defaults>
</compile_context>

<pallas_src>
import functools
import math

import jax
import jax.numpy as jnp
from jax.experimental import pallas as pl
from jax.experimental.pallas import tpu as pltpu


# --------------------------------------------------------------------------
# Kernel body (shared by all paths): add + scale on VPU, sin polynomial.
# Compute in f32 (safe on v5e), cast back to the storage dtype on store.
# jnp broadcasting inside the kernel handles the (ta,1,C) modulation block.
# --------------------------------------------------------------------------
def _sine_kernel(x_ref, m_ref, o_ref, *, w0):
    xv = x_ref[...].astype(jnp.float32)
    mv = m_ref[...].astype(jnp.float32)
    o_ref[...] = jnp.sin(w0 * (xv + mv)).astype(o_ref.dtype)


# --------------------------------------------------------------------------
# Chip-aware sizing helpers.
# --------------------------------------------------------------------------
def _vmem_capacity_bytes():
    try:
        info = pltpu.get_tpu_info()
        cap = int(getattr(info, "vmem_capacity_bytes", 0) or 0)
        if cap > 0:
            return cap
    except Exception:
        pass
    return 64 << 20  # conservative floor: v7x physical VMEM per TensorCore


def _tile_params(target_tile_bytes):
    vmem_cap = _vmem_capacity_bytes()
    if target_tile_bytes is None:
        # ~8 MiB/operand on 128 MiB-VMEM chips (v5e/v6e) halves grid-step count
        # on big arrays; ~4 MiB on 64 MiB-VMEM chips (v7x).
        target_tile_bytes = (8 << 20) if vmem_cap > (64 << 20) else (4 << 20)
    # Clamp so 3 arrays x 2 pipeline buffers + headroom always fit physical VMEM.
    target_tile_bytes = min(int(target_tile_bytes),
                            max(1 << 20, (vmem_cap - (16 << 20)) // 8))
    return target_tile_bytes, vmem_cap


def _vmem_limit(tile_bytes, vmem_cap):
    # 3 arrays x 2 buffers per grid step plus headroom, capped at physical VMEM.
    want = max(32 << 20, int(6 * tile_bytes * 1.5))
    return max(16 << 20, min(vmem_cap - (8 << 20), want))


def _broadcast_decomp(big_shape, small_shape):
    """Collapse big_shape -> (A, B, C) with small_shape -> (A, 1, C), where the
    broadcast axes of `small` form one contiguous run.  Returns (A, B, C) or
    None if the pattern is not [match...][broadcast...][match...]."""
    k = len(big_shape)
    s = (1,) * (k - len(small_shape)) + tuple(small_shape)
    cats = []
    for bs, ss in zip(big_shape, s):
        if ss == bs or bs == 1:
            cats.append("M")
        elif ss == 1:
            cats.append("B")
        else:
            return None  # not broadcastable (caller already validated)
    if "B" not in cats:
        return None  # sizes match after reshape — use the equal-shape path
    first = cats.index("B")
    last = k - 1 - cats[::-1].index("B")
    for i in range(first, last + 1):
        if cats[i] == "M" and big_shape[i] != 1:
            return None  # interleaved match/broadcast — fall back
    a = math.prod(big_shape[:first]) if first > 0 else 1
    b = math.prod(big_shape[first:last + 1])
    c = math.prod(big_shape[last + 1:]) if last + 1 < k else 1
    return int(a), int(b), int(c)


# --------------------------------------------------------------------------
# Equal-size path: flat lane-dense 2D slab (rows, C), C a multiple of 128,
# so every store is a full unmasked vst.
# --------------------------------------------------------------------------
def _sine_flat(xf, mf, w0, out_dtype, C, dtype_bytes, target_tile_bytes, vmem_cap):
    n = xf.shape[0]
    rows = n // C
    x2 = xf.reshape(rows, C)
    m2 = mf.reshape(rows, C)

    gran = 8 if dtype_bytes >= 4 else 16
    total_bytes = rows * C * dtype_bytes
    tr = max(1, target_tile_bytes // (C * dtype_bytes))
    if tr >= rows:
        tr = rows
        # v7x megacore: guarantee >= 2 grid blocks on non-trivial arrays so
        # dimension_semantics=("parallel",) can use both TensorCores.
        if total_bytes > (1 << 20) and rows > gran:
            half = -(-rows // 2)
            tr = max(gran, ((half + gran - 1) // gran) * gran)
    else:
        tr = max(gran, (tr // gran) * gran)

    grid = (pl.cdiv(rows, tr),)
    tile_bytes = tr * C * dtype_bytes

    out2 = pl.pallas_call(
        functools.partial(_sine_kernel, w0=w0),
        out_shape=jax.ShapeDtypeStruct((rows, C), out_dtype),
        grid_spec=pltpu.PrefetchScalarGridSpec(
            num_scalar_prefetch=0,
            grid=grid,
            in_specs=[
                pl.BlockSpec((tr, C), lambda i: (i, 0)),
                pl.BlockSpec((tr, C), lambda i: (i, 0)),
            ],
            out_specs=pl.BlockSpec((tr, C), lambda i: (i, 0)),
        ),
        compiler_params=pltpu.CompilerParams(
            dimension_semantics=("parallel",),
            vmem_limit_bytes=_vmem_limit(tile_bytes, vmem_cap),
        ),
    )(x2, m2)
    return out2.reshape(-1)


# --------------------------------------------------------------------------
# Broadcast path: x viewed as (A, B, C), modulations as (A, 1, C).  The
# modulation BlockSpec index_map ignores the B grid axis, so the same small
# block is reused (not re-DMA'd) across the broadcast dimension and the
# broadcast is never materialized in HBM.
# --------------------------------------------------------------------------
def _sine_bcast(big, small, w0, out_dtype, decomp, dtype_bytes,
                target_tile_bytes, vmem_cap):
    A, B, C = decomp
    x3 = big.reshape(A, B, C)
    m3 = small.reshape(A, 1, C)

    gran = 8 if dtype_bytes >= 4 else 16
    row_bytes = C * dtype_bytes  # one (1, 1, C) slice
    total_bytes = A * B * row_bytes

    if B * row_bytes <= target_tile_bytes:
        tb = B
        ta = min(A, max(1, target_tile_bytes // (B * row_bytes)))
    else:
        ta = 1
        tb = max(gran, ((target_tile_bytes // row_bytes) // gran) * gran)

    # v7x megacore: guarantee >= 2 grid blocks on non-trivial arrays.
    if total_bytes > (1 << 20) and pl.cdiv(A, ta) * pl.cdiv(B, tb) < 2:
        if A >= 2:
            ta = -(-A // 2)
        elif B > gran:
            half = -(-B // 2)
            tb = max(gran, ((half + gran - 1) // gran) * gran)

    grid = (pl.cdiv(A, ta), pl.cdiv(B, tb))
    tile_bytes = ta * tb * row_bytes

    return pl.pallas_call(
        functools.partial(_sine_kernel, w0=w0),
        out_shape=jax.ShapeDtypeStruct((A, B, C), out_dtype),
        grid_spec=pltpu.PrefetchScalarGridSpec(
            num_scalar_prefetch=0,
            grid=grid,
            in_specs=[
                pl.BlockSpec((ta, tb, C), lambda a, b: (a, b, 0)),
                # Small modulation block: constant along the broadcast (b) axis.
                pl.BlockSpec((ta, 1, C), lambda a, b: (a, 0, 0)),
            ],
            out_specs=pl.BlockSpec((ta, tb, C), lambda a, b: (a, b, 0)),
        ),
        compiler_params=pltpu.CompilerParams(
            dimension_semantics=("parallel", "parallel"),
            vmem_limit_bytes=_vmem_limit(tile_bytes, vmem_cap),
        ),
    )(x3, m3)


# --------------------------------------------------------------------------
# Public wrapper: out = sin(w0 * (x + modulations)), broadcasting like torch.
# --------------------------------------------------------------------------
def sine(x, modulations, w0=30.0, target_tile_bytes=None):
    x = jnp.asarray(x)
    modulations = jnp.asarray(modulations)
    w0 = float(w0)

    out_shape = jnp.broadcast_shapes(x.shape, modulations.shape)
    out_dtype = jnp.promote_types(x.dtype, modulations.dtype)
    N = math.prod(out_shape) if out_shape else 1
    if N == 0:
        return jnp.zeros(out_shape, out_dtype)

    dtype_bytes = jnp.dtype(out_dtype).itemsize
    gran = 8 if dtype_bytes >= 4 else 16
    target_tile_bytes, vmem_cap = _tile_params(target_tile_bytes)

    # `big` carries the output shape; the op is symmetric in (x, modulations).
    if x.shape == out_shape:
        big, small = x, modulations
    elif modulations.shape == out_shape:
        big, small = modulations, x
    else:  # both operands broadcast (rare) — materialize both
        big = jnp.broadcast_to(x, out_shape)
        small = jnp.broadcast_to(modulations, out_shape)

    # Broadcast path: feed the small modulation block directly, no broadcast
    # materialization (saves up to 1/3 of HBM traffic in the mem-bound regime).
    if small.size != big.size:
        decomp = _broadcast_decomp(out_shape, small.shape)
        if (decomp is not None and decomp[2] >= 8
                and decomp[2] * dtype_bytes * gran <= target_tile_bytes):
            out3 = _sine_bcast(big, small, w0, out_dtype, decomp, dtype_bytes,
                               target_tile_bytes, vmem_cap)
            return out3.reshape(out_shape)
        # Pattern not expressible with a single index_map — materialize (rare).
        small = jnp.broadcast_to(small, out_shape)

    small = small.reshape(out_shape)
    xf = big.reshape(-1)
    mf = small.reshape(-1)

    # Pick the largest lane-dense width C (multiple of 128) that divides N.
    C = None
    for c in (2048, 1024, 512, 256, 128):
        if N % c == 0:
            C = c
            break

    if C is None:
        # Rare fallback (N not a multiple of 128): run the kernel on the
        # lane-aligned bulk and finish the tail (< 128 aligned remainder) in
        # plain jnp — avoids the old full-array pad + slice HBM round-trip.
        C = 128
        n_main = (N // C) * C
        tail = jnp.sin(w0 * (xf[n_main:].astype(jnp.float32)
                             + mf[n_main:].astype(jnp.float32))).astype(out_dtype)
        if n_main == 0:
            return tail.reshape(out_shape)
        main = _sine_flat(xf[:n_main], mf[:n_main], w0, out_dtype, C,
                          dtype_bytes, target_tile_bytes, vmem_cap)
        return jnp.concatenate([main, tail]).reshape(out_shape)

    out = _sine_flat(xf, mf, w0, out_dtype, C, dtype_bytes,
                     target_tile_bytes, vmem_cap)
    return out.reshape(out_shape)


if __name__ == "__main__":
    key = jax.random.PRNGKey(0)
    kx, km, kb = jax.random.split(key, 3)
    w0 = 30.0

    # Small shapes consistent with SIREN usage: (batch, seq, hidden).
    x = jax.random.normal(kx, (2, 8, 32), dtype=jnp.float32)

    # Case 1: equal shapes — flat lane-dense path.
    mods = jax.random.normal(km, (2, 8, 32), dtype=jnp.float32)
    out = jax.block_until_ready(sine(x, mods, w0))
    ref = jnp.sin(w0 * (x + mods))
    assert out.shape == ref.shape and out.dtype == ref.dtype
    assert jnp.allclose(out, ref, atol=1e-5, rtol=1e-5)

    # Case 2: broadcast modulations (B, 1, H) — small-block re-read path.
    mods_b = jax.random.normal(kb, (2, 1, 32), dtype=jnp.float32)
    out_b = jax.block_until_ready(sine(x, mods_b, w0))
    ref_b = jnp.sin(w0 * (x + mods_b))
    assert out_b.shape == ref_b.shape
    assert jnp.allclose(out_b, ref_b, atol=1e-5, rtol=1e-5)

    # Case 3: non-128-divisible element count — main kernel + jnp tail path.
    x3 = jax.random.normal(kx, (2, 8, 31), dtype=jnp.float32)
    m3 = jax.random.normal(km, (2, 8, 31), dtype=jnp.float32)
    out3 = jax.block_until_ready(sine(x3, m3, w0))
    ref3 = jnp.sin(w0 * (x3 + m3))
    assert out3.shape == ref3.shape
    assert jnp.allclose(out3, ref3, atol=1e-5, rtol=1e-5)

    print("KERNEL_OK")
</pallas_src>

<mosaic_0001>
module attributes {stable_mosaic.version = 11 : i64} {
  func.func @_sine_kernel(%arg0: i32, %arg1: memref<1x512xf32, #tpu.memory_space<vmem>>, %arg2: memref<1x512xf32, #tpu.memory_space<vmem>>, %arg3: memref<1x512xf32, #tpu.memory_space<vmem>>) attributes {dimension_semantics = [#tpu.dimension_semantics<parallel>], iteration_bounds = array<i64: 1>, scalar_prefetch = 0 : i64, scratch_operands = 0 : i64, tpu.core_type = #tpu.core_type<tc>, window_params = [{transform_indices = @transform_0, window_bounds = array<i64: 1, 512>}, {transform_indices = @transform_1, window_bounds = array<i64: 1, 512>}, {transform_indices = @transform_2, window_bounds = array<i64: 1, 512>}]} {
    %c0 = arith.constant 0 : index
    %c0_0 = arith.constant 0 : index
    %0 = vector.load %arg1[%c0, %c0_0] : memref<1x512xf32, #tpu.memory_space<vmem>>, vector<1x512xf32>
    %c0_1 = arith.constant 0 : index
    %c0_2 = arith.constant 0 : index
    %1 = vector.load %arg2[%c0_1, %c0_2] : memref<1x512xf32, #tpu.memory_space<vmem>>, vector<1x512xf32>
    %2 = arith.addf %0, %1 : vector<1x512xf32>
    %cst = arith.constant 3.000000e+01 : f32
    %3 = vector.broadcast %cst : f32 to vector<1x512xf32>
    %4 = arith.mulf %3, %2 : vector<1x512xf32>
    %5 = math.sin %4 : vector<1x512xf32>
    %c0_3 = arith.constant 0 : index
    %c0_4 = arith.constant 0 : index
    %6 = vector.load %arg3[%c0_3, %c0_4] : memref<1x512xf32, #tpu.memory_space<vmem>>, vector<1x512xf32>
    tpu.vector_store %arg3[%c0_3, %c0_4], %5 {strides = array<i32>} : memref<1x512xf32, #tpu.memory_space<vmem>>, vector<1x512xf32>,
    return
  }
  func.func @transform_0(%arg0: i32) -> (i32, i32) {
    %c0_i32 = arith.constant 0 : i32
    %c0_i32_0 = arith.constant 0 : i32
    return %arg0, %c0_i32 : i32, i32
  }
  func.func @transform_1(%arg0: i32) -> (i32, i32) {
    %c0_i32 = arith.constant 0 : i32
    %c0_i32_0 = arith.constant 0 : i32
    return %arg0, %c0_i32 : i32, i32
  }
  func.func @transform_2(%arg0: i32) -> (i32, i32) {
    %c0_i32 = arith.constant 0 : i32
    %c0_i32_0 = arith.constant 0 : i32
    return %arg0, %c0_i32 : i32, i32
  }
}

</mosaic_0001>

<llo_original>
// kernel: tpu_custom_call.1
$region0: #{tpu_custom_call.1}
  #allocation0 [shape = 'u32[]', space=smem, size = 0x4, offset = 0x4, fixed_abs, tag = 'smem constant byte address 0x4 - core index']
  #allocation1 [shape = 'u32[144,128]{1,0:T(1,128)}', space=vmem, size = 0x12000, scoped, tag = 'internal scratch']
  %s0 = inlined_call_operand.hbm [shape: f32[1,512], index: 0, kind: input, shape index: {}]
  %s1 = inlined_call_operand.hbm [shape: f32[1,512], index: 1, kind: input, shape index: {}]
  %s2 = inlined_call_operand.hbm [shape: f32[1,512], index: 2, kind: output, shape index: {}]
  %s3 = sld [smem:[#allocation0]]
  $region26: #{tpu_custom_call.1} parent=0
    _
  %s5 = ssub.s32 1, %s3
  %s6 = scalar_select 0, %s5, %s3
  $region1: #{tpu_custom_call.1} parent=0
    #allocation2 [shape = 'u8[2048]{0}', space=vmem, size = 0x800, scoped, tag = 'input window, operand 0, single buffered']
    #allocation3 [shape = 's32[1]{0}', space=sflag, size = 0x4, scoped, tag = 'scoped memory for tpu_custom_call.1']
    #allocation4 [shape = 's32[1]{0}', space=sflag, size = 0x4, scoped, tag = 'scoped memory for tpu_custom_call.1']
    #allocation5 [shape = 'u8[2048]{0}', space=vmem, size = 0x800, scoped, tag = 'input window, operand 1, single buffered']
    #allocation6 [shape = 's32[1]{0}', space=sflag, size = 0x4, scoped, tag = 'scoped memory for tpu_custom_call.1']
    #allocation7 [shape = 'u8[2048]{0}', space=vmem, size = 0x800, scoped, tag = 'output window, operand 0, single buffered']
    %7 = vsyncpa [#allocation3], 0
    %8 = vsyncpa [#allocation6], 0
    %9 = vsyncpa [#allocation4], 0
    // Predicated region
    $region2: #{tpu_custom_call.1} parent=1 // pred_check
      _
    $region3: #{tpu_custom_call.1} parent=1 // pred_check_branch
      %11 = sbr.rel (0) target = $region5
    $region4: #{tpu_custom_call.1} parent=1 // pred_region
      %s13 = ssub.s32 64, 64
      %14 = vsyncadd [#allocation3], %s13
      %s16 = sshll.u32 [#allocation2], 4
      %s17 = int_to_ptr.vmem [resolvable:$true] %s16
      %19 = dma.hbm_to_vmem [thread:$0]  %s0, 64, %s17, [#allocation3]
    $region5: #{tpu_custom_call.1} parent=1 // pred_fallthru
      _
    // Predicated region
    $region6: #{tpu_custom_call.1} parent=1 // pred_check
      _
    $region7: #{tpu_custom_call.1} parent=1 // pred_check_branch
      %21 = sbr.rel (0) target = $region9
    $region8: #{tpu_custom_call.1} parent=1 // pred_region
      %s23 = ssub.s32 64, 64
      %24 = vsyncadd [#allocation6], %s23
      %s26 = sshll.u32 [#allocation5], 4
      %s27 = int_to_ptr.vmem [resolvable:$true] %s26
      %29 = dma.hbm_to_vmem [thread:$0]  %s1, 64, %s27, [#allocation6]
    $region9: #{tpu_custom_call.1} parent=1 // pred_fallthru
      _
    // Predicated region
    $region10: #{tpu_custom_call.1} parent=1 // pred_check
      _
    $region11: #{tpu_custom_call.1} parent=1 // pred_check_branch
      %31 = sbr.rel (0) target = $region13
    $region12: #{tpu_custom_call.1} parent=1 // pred_region
      %32 = dma.done [#allocation3], 64
    $region13: #{tpu_custom_call.1} parent=1 // pred_fallthru
      _
    // Predicated region
    $region14: #{tpu_custom_call.1} parent=1 // pred_check
      _
    $region15: #{tpu_custom_call.1} parent=1 // pred_check_branch
      %34 = sbr.rel (0) target = $region17
    $region16: #{tpu_custom_call.1} parent=1 // pred_region
      %35 = dma.done [#allocation6], 64
    $region17: #{tpu_custom_call.1} parent=1 // pred_fallthru
      _
    %v36 = vld [vmem:[#allocation2] sm:$0xf]
    %v37 = vld [vmem:[#allocation5] sm:$0xf]
    %v38 = vadd.f32 %v36, %v37
    %v39 = vmul.f32 %v38, 30.0
    %v40 = vand.u32 2147483647, %v39
    %vm41 = vcmp.le.f32.partialorder %v40, 0.7853982
    %vm42 = vcmp.lt.s32.totalorder %v39, 0
    %v43 = vand.u32 %v39, 2139095040
    %v44 = vshrl.u32 %v43, 23
    %v45 = vsub.s32 %v44, 127
    %v46 = vand.u32 2147483647, %v39
    %v47 = vand.u32 %v46, 8388607
    %v48 = vor.u32 %v47, 8388608
    %v49 = vsub.s32 0, %v48
    %v50 = vadd.s32 %v45, 1
    %vm51 = vcmp.gt.s32.totalorder %v50, 0
    %v52 = vsel %vm51, %v50, 0
    %v53 = vshrl.u32 %v52, 5
    %v54 = vand.u32 %v52, 31
    %v55 = vsub.s32 32, %v54
    %v56 = vshrl.u32 683565275, %v55
    %v57 = vshll.u32 683565275, %v54
    %v58 = vshrl.u32 2475754826, %v55
    %v59 = vor.u32 %v57, %v58
    %v60 = vshll.u32 2475754826, %v54
    %v61 = vshrl.u32 2131351028, %v55
    %v62 = vor.u32 %v60, %v61
    %v63 = vshll.u32 2131351028, %v54
    %v64 = vshrl.u32 2102212464, %v55
    %v65 = vor.u32 %v63, %v64
    %v66 = vshll.u32 2102212464, %v54
    %v67 = vshrl.u32 920167782, %v55
    %v68 = vor.u32 %v66, %v67
    %v69 = vshll.u32 920167782, %v54
    %v70 = vshrl.u32 1326507024, %v55
    %v71 = vor.u32 %v69, %v70
    %vm72 = vcmp.lt.s32.totalorder %v53, 1
    %vm73 = vcmp.lt.s32.totalorder %v53, 2
    %vm74 = vcmp.lt.s32.totalorder %v53, 3
    %vm75 = vcmp.lt.s32.totalorder %v53, 4
    %v76 = vsel %vm72, %v56, %v59
    %v77 = vsel %vm75, %v65, 2102212464
    %v78 = vsel %vm74, %v62, %v77
    %v79 = vsel %vm73, %v76, %v78
    %v80 = vsel %vm72, %v59, %v62
    %v81 = vsel %vm75, %v68, 920167782
    %v82 = vsel %vm74, %v65, %v81
    %v83 = vsel %vm73, %v80, %v82
    %v84 = vsel %vm72, %v62, %v65
    %v85 = vsel %vm75, %v71, 1326507024
    %v86 = vsel %vm74, %v68, %v85
    %v87 = vsel %vm73, %v84, %v86
    %v88 = vshll.u32 %v48, 8
    %v89 = vmul.u32.u64.compose %v88, %v87
    %v90 = vextract.low.u32 %v89
    %v91 = vextract.high.u32 %v89
    %v92 = vmul.u32.u64.compose %v88, %v83
    %v93 = vextract.low.u32 %v92
    %v94 = vextract.high.u32 %v92
    %v95 = vmul.u32 %v88, %v79
    %v96 = vadd.s32 %v91, %v93
    %vm97 = vc.u32 %v91, %v93
    %v98 = vadd.s32 %v94, 1
    %v99 = vsel %vm97, %v98, %v94
    %v100 = vadd.s32 %v95, %v99
    %v101 = vadd.s32 %v100, 536870912
    %v102 = vshrl.u32 %v101, 30
    %v103 = vshll.u32 %v102, 30
    %v104 = vsub.s32 %v100, %v103
    %vm105 = vcmp.lt.s32.totalorder %v104, 0
    %v106 = vsub.s32 0, %v104
    %v107 = vsel %vm105, %v106, %v104
    %v108 = vclz %v107
    %v109 = vsub.s32 %v108, 2
    %vm110 = vcmp.gt.s32.totalorder 0, %v109
    %v111 = vsel %vm110, 0, %v109
    %v112 = vsub.s32 32, %v111
    %v113 = vshll.u32 %v104, %v111
    %v114 = vshrl.u32 %v96, %v112
    %v115 = vor.u32 %v113, %v114
    %v116 = vsub.s32 4294967266, %v111
    %v117 = vadd.s32 %v116, 127
    %v118 = vshll.u32 %v117, 23
    %v119 = vor.u32 4788187, %v118
    %v120 = vand.u32 2147483647, %v119
    %v122 = vcvt.s32.f32 %v115
    %v123 = vmul.f32 %v122, %v120
    %v124 = vxor.u32 %v123, 2147483648
    %v125 = vsel %vm42, %v124, %v123
    %v126 = vsub.s32 4, %v102
    %v127 = vsel %vm42, %v126, %v102
    %v128 = vsel %vm41, %v39, %v125
    %v129 = vsel %vm41, 0, %v127
    %v130 = vcosq.f32.pop %v128
    %v131 = vsinq.f32.pop %v128
    %vm132 = vweird.f32 %v39
    %v133 = vadd.s32 %v129, 3
    %v134 = vand.u32 %v133, 3
    %vm135 = vcmp.lt.s32.totalorder %v134, 2
    %vm136 = vcmp.eq.s32.totalorder %v134, 0
    %v137 = vxor.u32 %v131, 2147483648
    %v138 = vsel %vm136, %v130, %v137
    %vm139 = vcmp.eq.s32.totalorder %v134, 2
    %v140 = vxor.u32 %v130, 2147483648
    %v141 = vsel %vm139, %v140, %v131
    %v142 = vsel %vm135, %v138, %v141
    %v143 = vsel %vm132, nan, %v142
    %v144 = vlaneseq
    %vm145 = vcmp.ge.s32.totalorder %v144, 0
    %vm146 = vcmp.lt.s32.totalorder %v144, 512
    %vm147 = vmand %vm145, %vm146
    %148 = vst.msk [vmem:[#allocation7] sm:$0xf] %vm147, %v143
    // Predicated region
    $region18: #{tpu_custom_call.1} parent=1 // pred_check
      _
    $region19: #{tpu_custom_call.1} parent=1 // pred_check_branch
      %150 = sbr.rel (0) target = $region21
    $region20: #{tpu_custom_call.1} parent=1 // pred_region
      %s152 = ssub.s32 64, 64
      %153 = vsyncadd [#allocation4], %s152
      %s155 = sshll.u32 [#allocation7], 4
      %s156 = int_to_ptr.vmem [resolvable:$true] %s155
      %158 = dma.vmem_to_hbm [thread:$0]  %s156, 64, %s2, [#allocation4]
    $region21: #{tpu_custom_call.1} parent=1 // pred_fallthru
      _
    // Predicated region
    $region22: #{tpu_custom_call.1} parent=1 // pred_check
      _
    $region23: #{tpu_custom_call.1} parent=1 // pred_check_branch
      %160 = sbr.rel (0) target = $region25
    $region24: #{tpu_custom_call.1} parent=1 // pred_region
      %161 = dma.done [#allocation4], 64
    $region25: #{tpu_custom_call.1} parent=1 // pred_fallthru
      _
    %162 = vsyncpa [#allocation3], 1
    %163 = vsyncpa [#allocation6], 1
    %164 = vsyncpa [#allocation4], 1

</llo_original>
